<compile_context>
chip_gen: v7x
topology: tpu7x:2x2x1
jax: 0.10.0
libtpu: 0.0.40
codegen_flags: <defaults>
</compile_context>

<pallas_src>
import jax
import jax.numpy as jnp
from jax import lax
from jax.experimental import pallas as pl
from jax.experimental.pallas import tpu as pltpu


def _round_up(n, m):
    return ((n + m - 1) // m) * m


def _cdiv(a, b):
    return (a + b - 1) // b


def _matmul_kernel(wt_ref, x_ref, o_ref):
    # wt_ref: [N, K] resident transposed weights; x_ref: [TM, K] tile.
    # Contract K on both operands -> lane-dense [N, TM] output block.
    o_ref[...] = lax.dot_general(
        wt_ref[...],
        x_ref[...],
        dimension_numbers=(((1,), (1,)), ((), ())),
        preferred_element_type=jnp.float32,
    ).astype(o_ref.dtype)


def single_nn_forward(x, weights, *, tm=4096):
    """x: [M, 300] f32, weights: [300, 4] f32 -> [M, 4] f32 (= x @ weights)."""
    M, K = x.shape
    K2, N = weights.shape
    assert K == K2, f"inner dims mismatch: {K} vs {K2}"

    # Tiny one-off transpose in the wrapper so the kernel output is lane-dense.
    wt = weights.T  # [N, K]

    # --- M tile selection (no padding of x in HBM) --------------------------
    # grid > 1  -> tm_eff must be a multiple of 128 (lane dim of the [N, tm]
    #              output block) and of 8 (sublane dim of the [tm, K] x block).
    # grid == 1 -> block dims equal the full array dims; any M is legal.
    n_blocks = max(1, _cdiv(M, tm))
    if n_blocks == 1 and M >= 256:
        # Keep >= 2 grid steps so v7x's two TensorCores can split the grid.
        n_blocks = 2
    if n_blocks == 1:
        tm_eff = M
    else:
        # Balance blocks so padding waste stays < 1 lane-tile per block.
        tm_eff = _round_up(_cdiv(M, n_blocks), 128)
    grid = (_cdiv(M, tm_eff),)

    itemsize = jnp.dtype(x.dtype).itemsize
    cost = pl.CostEstimate(
        flops=2 * M * K * N,
        transcendentals=0,
        bytes_accessed=(M * K + K * N + M * N) * itemsize,
    )

    out_t = pl.pallas_call(
        _matmul_kernel,
        out_shape=jax.ShapeDtypeStruct((N, M), x.dtype),
        grid=grid,
        in_specs=[
            # weights.T: full array, VMEM-resident across all grid steps.
            pl.BlockSpec((N, K), lambda i: (0, 0)),
            # x: tiled over M, default double-buffered pipelining.
            pl.BlockSpec((tm_eff, K), lambda i: (i, 0)),
        ],
        # Lane-dense output block; ragged last block's OOB columns are dropped.
        out_specs=pl.BlockSpec((N, tm_eff), lambda i: (0, i)),
        compiler_params=pltpu.CompilerParams(
            dimension_semantics=("parallel",),
            vmem_limit_bytes=48 * 1024 * 1024,
        ),
        cost_estimate=cost,
    )(wt, x)

    # [N, M] -> [M, N] to match the module's forward semantics.
    return out_t.T


if __name__ == "__main__":
    key = jax.random.PRNGKey(0)
    k_w, k_x, k_x2 = jax.random.split(key, 3)

    # Deterministic parameter init, mirroring torch.randn(300, 4).
    weights = jax.random.normal(k_w, (300, 4), dtype=jnp.float32)

    # Small batch; last dim must be 300 per the module's forward.
    M = 8
    x = jax.random.normal(k_x, (M, 300), dtype=jnp.float32)
    out = jax.block_until_ready(single_nn_forward(x, weights))
    ref = x @ weights
    assert out.shape == (M, 4)
    assert jnp.allclose(out, ref, atol=1e-4, rtol=1e-4), "mismatch vs reference"

    # Multi-block ragged path (grid > 1, last M block partial, no padding).
    M2 = 1000
    x2 = jax.random.normal(k_x2, (M2, 300), dtype=jnp.float32)
    out2 = jax.block_until_ready(single_nn_forward(x2, weights, tm=512))
    ref2 = x2 @ weights
    assert out2.shape == (M2, 4)
    assert jnp.allclose(out2, ref2, atol=1e-4, rtol=1e-4), "mismatch (tiled path)"

    # Default-tm path: exercises the "force >=2 grid steps" branch.
    out3 = jax.block_until_ready(single_nn_forward(x2, weights))
    assert out3.shape == (M2, 4)
    assert jnp.allclose(out3, ref2, atol=1e-4, rtol=1e-4), "mismatch (default tm)"

    print("KERNEL_OK")
</pallas_src>

<mosaic_0001>
module attributes {stable_mosaic.version = 11 : i64} {
  func.func @_matmul_kernel(%arg0: i32, %arg1: memref<4x300xf32, #tpu.memory_space<vmem>>, %arg2: memref<8x300xf32, #tpu.memory_space<vmem>>, %arg3: memref<4x8xf32, #tpu.memory_space<vmem>>) attributes {dimension_semantics = [#tpu.dimension_semantics<parallel>], iteration_bounds = array<i64: 1>, scalar_prefetch = 0 : i64, scratch_operands = 0 : i64, tpu.core_type = #tpu.core_type<tc>, window_params = [{pipeline_mode = #tpu.pipeline_mode<synchronous>, transform_indices = @transform_0, window_bounds = array<i64: 4, 300>}, {transform_indices = @transform_1, window_bounds = array<i64: 8, 300>}, {transform_indices = @transform_2, window_bounds = array<i64: 4, 8>}]} {
    %c0 = arith.constant 0 : index
    %c0_0 = arith.constant 0 : index
    %0 = vector.load %arg1[%c0, %c0_0] : memref<4x300xf32, #tpu.memory_space<vmem>>, vector<4x300xf32>
    %c0_1 = arith.constant 0 : index
    %c0_2 = arith.constant 0 : index
    %1 = vector.load %arg2[%c0_1, %c0_2] : memref<8x300xf32, #tpu.memory_space<vmem>>, vector<8x300xf32>
    %cst = arith.constant dense<0.000000e+00> : vector<4x8xf32>
    %2 = tpu.matmul %0, %1, %cst {dimension_numbers = #tpu.dot_dimension_numbers<[1], [1], [0], [0], [0, 0, 1, 0], [], []>} : vector<4x300xf32>, vector<8x300xf32>, vector<4x8xf32> -> vector<4x8xf32>
    %c0_3 = arith.constant 0 : index
    %c0_4 = arith.constant 0 : index
    %3 = vector.load %arg3[%c0_3, %c0_4] : memref<4x8xf32, #tpu.memory_space<vmem>>, vector<4x8xf32>
    tpu.vector_store %arg3[%c0_3, %c0_4], %2 {strides = array<i32>} : memref<4x8xf32, #tpu.memory_space<vmem>>, vector<4x8xf32>,
    return
  }
  func.func @transform_0(%arg0: i32) -> (i32, i32) {
    %c0_i32 = arith.constant 0 : i32
    %c0_i32_0 = arith.constant 0 : i32
    %c0_i32_1 = arith.constant 0 : i32
    return %c0_i32, %c0_i32_0 : i32, i32
  }
  func.func @transform_1(%arg0: i32) -> (i32, i32) {
    %c0_i32 = arith.constant 0 : i32
    %c0_i32_0 = arith.constant 0 : i32
    return %arg0, %c0_i32 : i32, i32
  }
  func.func @transform_2(%arg0: i32) -> (i32, i32) {
    %c0_i32 = arith.constant 0 : i32
    %c0_i32_0 = arith.constant 0 : i32
    return %c0_i32, %arg0 : i32, i32
  }
}

</mosaic_0001>

<llo_original>
// kernel: tpu_custom_call.1
$region0: #{tpu_custom_call.1}
  #allocation0 [shape = 'u32[]', space=smem, size = 0x4, offset = 0x4, fixed_abs, tag = 'smem constant byte address 0x4 - core index']
  #allocation1 [shape = 'u32[144,128]{1,0:T(1,128)}', space=vmem, size = 0x12000, scoped, tag = 'internal scratch']
  %s0 = inlined_call_operand.hbm [shape: f32[4,300], index: 0, kind: input, shape index: {}]
  %s1 = inlined_call_operand.hbm [shape: f32[8,300], index: 1, kind: input, shape index: {}]
  %s2 = inlined_call_operand.hbm [shape: f32[4,8], index: 2, kind: output, shape index: {}]
  %s3 = sld [smem:[#allocation0]]
  $region26: #{tpu_custom_call.1} parent=0
    _
  %s5 = ssub.s32 1, %s3
  %s6 = scalar_select 0, %s5, %s3
  $region1: #{tpu_custom_call.1} parent=0
    #allocation2 [shape = 'u8[6144]{0}', space=vmem, size = 0x1800, scoped, tag = 'input window, operand 0, single buffered']
    #allocation3 [shape = 's32[1]{0}', space=sflag, size = 0x4, scoped, tag = 'scoped memory for tpu_custom_call.1']
    #allocation4 [shape = 's32[1]{0}', space=sflag, size = 0x4, scoped, tag = 'scoped memory for tpu_custom_call.1']
    #allocation5 [shape = 'u8[12288]{0}', space=vmem, size = 0x3000, scoped, tag = 'input window, operand 1, single buffered']
    #allocation6 [shape = 's32[1]{0}', space=sflag, size = 0x4, scoped, tag = 'scoped memory for tpu_custom_call.1']
    #allocation7 [shape = 'u8[2048]{0}', space=vmem, size = 0x800, scoped, tag = 'output window, operand 0, single buffered']
    %7 = vsyncpa [#allocation3], 0
    %8 = vsyncpa [#allocation6], 0
    %9 = vsyncpa [#allocation4], 0
    // Predicated region
    $region2: #{tpu_custom_call.1} parent=1 // pred_check
      _
    $region3: #{tpu_custom_call.1} parent=1 // pred_check_branch
      %11 = sbr.rel (0) target = $region5
    $region4: #{tpu_custom_call.1} parent=1 // pred_region
      %s13 = ssub.s32 192, 192
      %14 = vsyncadd [#allocation3], %s13
      %s16 = sshll.u32 [#allocation2], 4
      %s17 = int_to_ptr.vmem [resolvable:$true] %s16
      %19 = dma.hbm_to_vmem [thread:$0]  %s0, 192, %s17, [#allocation3]
    $region5: #{tpu_custom_call.1} parent=1 // pred_fallthru
      _
    // Predicated region
    $region6: #{tpu_custom_call.1} parent=1 // pred_check
      _
    $region7: #{tpu_custom_call.1} parent=1 // pred_check_branch
      %21 = sbr.rel (0) target = $region9
    $region8: #{tpu_custom_call.1} parent=1 // pred_region
      %s23 = ssub.s32 384, 384
      %24 = vsyncadd [#allocation6], %s23
      %s26 = sshll.u32 [#allocation5], 4
      %s27 = int_to_ptr.vmem [resolvable:$true] %s26
      %29 = dma.hbm_to_vmem [thread:$0]  %s1, 384, %s27, [#allocation6]
    $region9: #{tpu_custom_call.1} parent=1 // pred_fallthru
      _
    // Predicated region
    $region10: #{tpu_custom_call.1} parent=1 // pred_check
      _
    $region11: #{tpu_custom_call.1} parent=1 // pred_check_branch
      %31 = sbr.rel (0) target = $region13
    $region12: #{tpu_custom_call.1} parent=1 // pred_region
      %32 = dma.done [#allocation3], 192
    $region13: #{tpu_custom_call.1} parent=1 // pred_fallthru
      _
    // Predicated region
    $region14: #{tpu_custom_call.1} parent=1 // pred_check
      _
    $region15: #{tpu_custom_call.1} parent=1 // pred_check_branch
      %34 = sbr.rel (0) target = $region17
    $region16: #{tpu_custom_call.1} parent=1 // pred_region
      %35 = dma.done [#allocation6], 384
    $region17: #{tpu_custom_call.1} parent=1 // pred_fallthru
      _
    %v36 = vld [vmem:[#allocation2] sm:$0xff]
    %v37 = vld [vmem:[#allocation2 + $0x8] sm:$0xf]
    %v38 = vld [vmem:[#allocation5] sm:$0xff]
    %v39 = vld [vmem:[#allocation5 + $0x8] sm:$0xff]
    %v40 = vld [vmem:[#allocation5 + $0x10] sm:$0xff]
    %v43 = vcombine.high %v36, %v36
    %vm45 = vcmask 359424
    %v46 = vsel %vm45, %v37, 0
    %v49 = vsel %vm45, %v40, 0
    %51 = vmatprep.subr.mxu0 %v39
    %52 = vmatpush1.xpose.msra.mxu0 %v38
    %53 = vmatprep.subr.mxu0 0.0
    %54 = vmatpush1.xpose.msra.mxu0 0.0
    %55 = vmatprep.subr.mxu0 0.0
    %56 = vmatpush1.xpose.msra.mxu0 0.0
    %57 = vmatprep.subr.mxu0 0.0
    %58 = vmatpush1.xpose.msra.mxu0 0.0
    %59 = vmatprep.subr.mxu0 0.0
    %60 = vmatpush1.xpose.msra.mxu0 0.0
    %61 = vmatprep.subr.mxu0 0.0
    %62 = vmatpush1.xpose.msra.mxu0 0.0
    %63 = vmatprep.subr.mxu0 0.0
    %64 = vmatpush1.xpose.msra.mxu0 0.0
    %65 = vmatprep.subr.mxu0 0.0
    %66 = vmatpush1.xpose.msra.mxu0 0.0
    %67 = vmatprep.subr.mxu0 0.0
    %68 = vmatpush1.xpose.msra.mxu0 0.0
    %69 = vmatprep.subr.mxu0 0.0
    %70 = vmatpush1.xpose.msra.mxu0 0.0
    %71 = vmatprep.subr.mxu0 0.0
    %72 = vmatpush1.xpose.msra.mxu0 0.0
    %73 = vmatprep.subr.mxu0 0.0
    %74 = vmatpush1.xpose.msra.mxu0 0.0
    %75 = vmatprep.subr.mxu0 0.0
    %76 = vmatpush1.xpose.msra.mxu0 0.0
    %77 = vmatprep.subr.mxu0 0.0
    %78 = vmatpush1.xpose.msra.mxu0 0.0
    %79 = vmatprep.subr.mxu0 0.0
    %80 = vmatpush1.xpose.msra.mxu0 0.0
    %81 = vmatprep.subr.mxu0 0.0
    %82 = vmatpush1.xpose.msra.mxu0 0.0
    %83 = vmatprep.subr.mxu0 0.0
    %84 = vmatpush1.xpose.msra.mxu0 0.0
    %85 = vmatprep.subr.mxu0 0.0
    %86 = vmatpush1.xpose.msra.mxu0 0.0
    %87 = vmatprep.subr.mxu0 0.0
    %88 = vmatpush1.xpose.msra.mxu0 0.0
    %89 = vmatprep.subr.mxu0 0.0
    %90 = vmatpush1.xpose.msra.mxu0 0.0
    %91 = vmatprep.subr.mxu0 0.0
    %92 = vmatpush1.xpose.msra.mxu0 0.0
    %93 = vmatprep.subr.mxu0 0.0
    %94 = vmatpush1.xpose.msra.mxu0 0.0
    %95 = vmatprep.subr.mxu0 0.0
    %96 = vmatpush1.xpose.msra.mxu0 0.0
    %97 = vmatprep.subr.mxu0 0.0
    %98 = vmatpush1.xpose.msra.mxu0 0.0
    %99 = vmatprep.subr.mxu0 0.0
    %100 = vmatpush1.xpose.msra.mxu0 0.0
    %101 = vmatprep.subr.mxu0 0.0
    %102 = vmatpush1.xpose.msra.mxu0 0.0
    %103 = vmatprep.subr.mxu0 0.0
    %104 = vmatpush1.xpose.msra.mxu0 0.0
    %105 = vmatprep.subr.mxu0 0.0
    %106 = vmatpush1.xpose.msra.mxu0 0.0
    %107 = vmatprep.subr.mxu0 0.0
    %108 = vmatpush1.xpose.msra.mxu0 0.0
    %109 = vmatprep.subr.mxu0 0.0
    %110 = vmatpush1.xpose.msra.mxu0 0.0
    %111 = vmatprep.subr.mxu0 0.0
    %112 = vmatpush1.xpose.msra.mxu0 0.0
    %113 = vmatprep.subr.mxu0 0.0
    %114 = vmatpush1.xpose.msra.mxu0 0.0
    %115 = vmatprep.mubr.f32.mxu0 %v43
    %116 = vmatmul.mubr.f32.gmra.mrb[0].mxu0 %v36
    %v117 = vpop.f32.mrb[0].mxu0
    %v118 = vadd.f32 0.0, %v117
    %v119 = vpop.f32.mrb[0].mxu0
    %120 = vdwg.mxu0
    %121 = vmatprep.subr.mxu0 0.0
    %122 = vmatpush1.xpose.msra.mxu0 %v49
    %123 = vmatprep.subr.mxu0 0.0
    %124 = vmatpush1.xpose.msra.mxu0 0.0
    %125 = vmatprep.subr.mxu0 0.0
    %126 = vmatpush1.xpose.msra.mxu0 0.0
    %127 = vmatprep.subr.mxu0 0.0
    %128 = vmatpush1.xpose.msra.mxu0 0.0
    %129 = vmatprep.subr.mxu0 0.0
    %130 = vmatpush1.xpose.msra.mxu0 0.0
    %131 = vmatprep.subr.mxu0 0.0
    %132 = vmatpush1.xpose.msra.mxu0 0.0
    %133 = vmatprep.subr.mxu0 0.0
    %134 = vmatpush1.xpose.msra.mxu0 0.0
    %135 = vmatprep.subr.mxu0 0.0
    %136 = vmatpush1.xpose.msra.mxu0 0.0
    %137 = vmatprep.subr.mxu0 0.0
    %138 = vmatpush1.xpose.msra.mxu0 0.0
    %139 = vmatprep.subr.mxu0 0.0
    %140 = vmatpush1.xpose.msra.mxu0 0.0
    %141 = vmatprep.subr.mxu0 0.0
    %142 = vmatpush1.xpose.msra.mxu0 0.0
    %143 = vmatprep.subr.mxu0 0.0
    %144 = vmatpush1.xpose.msra.mxu0 0.0
    %145 = vmatprep.subr.mxu0 0.0
    %146 = vmatpush1.xpose.msra.mxu0 0.0
    %147 = vmatprep.subr.mxu0 0.0
    %148 = vmatpush1.xpose.msra.mxu0 0.0
    %149 = vmatprep.subr.mxu0 0.0
    %150 = vmatpush1.xpose.msra.mxu0 0.0
    %151 = vmatprep.subr.mxu0 0.0
    %152 = vmatpush1.xpose.msra.mxu0 0.0
    %153 = vmatprep.subr.mxu0 0.0
    %154 = vmatpush1.xpose.msra.mxu0 0.0
    %155 = vmatprep.subr.mxu0 0.0
    %156 = vmatpush1.xpose.msra.mxu0 0.0
    %157 = vmatprep.subr.mxu0 0.0
    %158 = vmatpush1.xpose.msra.mxu0 0.0
    %159 = vmatprep.subr.mxu0 0.0
    %160 = vmatpush1.xpose.msra.mxu0 0.0
    %161 = vmatprep.subr.mxu0 0.0
    %162 = vmatpush1.xpose.msra.mxu0 0.0
    %163 = vmatprep.subr.mxu0 0.0
    %164 = vmatpush1.xpose.msra.mxu0 0.0
    %165 = vmatprep.subr.mxu0 0.0
    %166 = vmatpush1.xpose.msra.mxu0 0.0
    %167 = vmatprep.subr.mxu0 0.0
    %168 = vmatpush1.xpose.msra.mxu0 0.0
    %169 = vmatprep.subr.mxu0 0.0
    %170 = vmatpush1.xpose.msra.mxu0 0.0
    %171 = vmatprep.subr.mxu0 0.0
    %172 = vmatpush1.xpose.msra.mxu0 0.0
    %173 = vmatprep.subr.mxu0 0.0
    %174 = vmatpush1.xpose.msra.mxu0 0.0
    %175 = vmatprep.subr.mxu0 0.0
    %176 = vmatpush1.xpose.msra.mxu0 0.0
    %177 = vmatprep.subr.mxu0 0.0
    %178 = vmatpush1.xpose.msra.mxu0 0.0
    %179 = vmatprep.subr.mxu0 0.0
    %180 = vmatpush1.xpose.msra.mxu0 0.0
    %181 = vmatprep.subr.mxu0 0.0
    %182 = vmatpush1.xpose.msra.mxu0 0.0
    %183 = vmatprep.subr.mxu0 0.0
    %184 = vmatpush1.xpose.msra.mxu0 0.0
    %185 = vmatprep.mubr.f32.mxu0 0.0
    %186 = vmatmul.mubr.f32.gmra.mrb[0].mxu0 %v46
    %v187 = vpop.f32.mrb[0].mxu0
    %v188 = vadd.f32 %v118, %v187
    %v189 = vpop.f32.mrb[0].mxu0
    %190 = vdwg.mxu0
    %vm191 = vcmask 60416
    %192 = vst.msk [vmem:[#allocation7] sm:$0xf] %vm191, %v188
    // Predicated region
    $region18: #{tpu_custom_call.1} parent=1 // pred_check
      _
    $region19: #{tpu_custom_call.1} parent=1 // pred_check_branch
      %194 = sbr.rel (0) target = $region21
    $region20: #{tpu_custom_call.1} parent=1 // pred_region
      %s196 = ssub.s32 64, 64
      %197 = vsyncadd [#allocation4], %s196
      %s199 = sshll.u32 [#allocation7], 4
      %s200 = int_to_ptr.vmem [resolvable:$true] %s199
      %202 = dma.vmem_to_hbm [thread:$0]  %s200, 64, %s2, [#allocation4]
    $region21: #{tpu_custom_call.1} parent=1 // pred_fallthru
      _
    // Predicated region
    $region22: #{tpu_custom_call.1} parent=1 // pred_check
      _
    $region23: #{tpu_custom_call.1} parent=1 // pred_check_branch
      %204 = sbr.rel (0) target = $region25
    $region24: #{tpu_custom_call.1} parent=1 // pred_region
      %205 = dma.done [#allocation4], 64
    $region25: #{tpu_custom_call.1} parent=1 // pred_fallthru
      _
    %206 = vsyncpa [#allocation3], 1
    %207 = vsyncpa [#allocation6], 1
    %208 = vsyncpa [#allocation4], 1

</llo_original>
